<compile_context>
chip_gen: v6e
topology: v6e:2x2x1
jax: 0.10.0
libtpu: 0.0.40
codegen_flags: <defaults>
</compile_context>

<pallas_src>
import jax
import jax.numpy as jnp
from jax.experimental import pallas as pl
from jax.experimental.pallas import tpu as pltpu

IN_DIM, HID_DIM, OUT_DIM = 2, 32, 2
NCHUNK = 4                      # batch chunks packed along the sublane axis


def _round_up(n, m):
    return ((n + m - 1) // m) * m


def simplenet_kernel(xp_ref, w1_ref, b1_ref, w2_ref, b2_ref, op_ref):
    # xp_ref / op_ref: (8, TB) sublane-dense blocks.  Row 2*c + f holds
    # feature f of batch chunk c (c in 0..3); batch samples sit on lanes.
    xp = xp_ref[...]                      # (8, TB)
    w1 = w1_ref[...]                      # (32, 2)
    w2 = w2_ref[...]                      # (2, 32)
    b1 = b1_ref[...]                      # (32, 1) broadcasts over lanes
    b2 = b2_ref[...]                      # (2, 1)
    w1c0 = w1[:, 0:1]                     # (32, 1)
    w1c1 = w1[:, 1:2]                     # (32, 1)
    for c in range(NCHUNK):               # static unroll over packed chunks
        x0 = xp[2 * c:2 * c + 1, :]       # (1, TB)
        x1 = xp[2 * c + 1:2 * c + 2, :]   # (1, TB)
        # fc1 on the VPU; b1 folded into the multiply-add chain.
        h = b1 + w1c0 * x0                # (32, TB)
        h = h + w1c1 * x1
        h = jnp.maximum(h, 0.0)           # ReLU
        # fc2 on the MXU: (2, 32) @ (32, TB); batch sits on the MXU N axis.
        o = jnp.dot(w2, h, preferred_element_type=jnp.float32) + b2
        op_ref[2 * c:2 * c + 2, :] = o.astype(op_ref.dtype)
        # (HBM writeback of the whole (8, TB) block is a single dense DMA.)


def _choose_tb(bc):
    """Pick the lane tile (columns per packed chunk) for per-chunk length bc."""
    try:
        vmem_phys = pltpu.get_tpu_info().vmem_capacity_bytes
    except Exception:                     # pragma: no cover - conservative default
        vmem_phys = 64 << 20              # v7x per-TC VMEM (smallest generation)
    # Conservative footprint per grid step: double-buffered (8,tb) in/out
    # (128*tb B) + per-chunk (32,tb) f32 intermediates + temporaries
    # ~= 1 KiB per lane column.  Keep well under the 32 MiB scoped limit and
    # under a quarter of physical VMEM (matters on v7x's 64 MiB).
    budget = min(16 << 20, vmem_phys // 4)
    cap = max(128, (budget // 1024) // 128 * 128)      # lane columns, mult of 128
    if bc <= cap:
        return _round_up(bc, 128)
    # Large batch: use >= 2 tiles so a 2-TC chip (v7x) can split the
    # "parallel" batch axis across cores.
    return min(cap, _round_up(pl.cdiv(bc, 2), 128))


def simplenet_forward(x, w1, b1, w2, b2, *, tb=None, use_pallas=None):
    """x: (B, 2); w1: (32, 2); b1: (32,); w2: (2, 32); b2: (2,) -> (B, 2)."""
    B = x.shape[0]
    if use_pallas is None:
        use_pallas = B >= 1024
    if (not use_pallas) or B == 0:
        # Small-batch fallback: kernel launch + padding + relayout overhead
        # dominates below ~1k samples.
        return jnp.maximum(x @ w1.T + b1, 0.0) @ w2.T + b2

    bc = pl.cdiv(B, NCHUNK)               # columns per packed chunk (pre-pad)
    if tb is None:
        tb = _choose_tb(bc)
    else:
        tb = _round_up(tb, 128)
    bc_pad = _round_up(bc, tb)
    n_tiles = bc_pad // tb
    b_pad = NCHUNK * bc_pad

    # Pack x (B, 2) -> (8, bc_pad): row 2*c + f holds feature f of batch
    # chunk c.  Single lax.pad + reshape/transpose (no zeros + scatter).
    xpad = jax.lax.pad(x.astype(jnp.float32), jnp.float32(0.0),
                       ((0, b_pad - B, 0), (0, 0, 0)))
    xp = xpad.reshape(NCHUNK, bc_pad, IN_DIM).transpose(0, 2, 1).reshape(
        NCHUNK * IN_DIM, bc_pad)

    b1c = b1.reshape(HID_DIM, 1).astype(jnp.float32)
    b2c = b2.reshape(OUT_DIM, 1).astype(jnp.float32)

    cost = pl.CostEstimate(
        flops=2 * b_pad * (IN_DIM * HID_DIM + HID_DIM * OUT_DIM),
        transcendentals=0,
        bytes_accessed=4 * (b_pad * (IN_DIM + OUT_DIM)
                            + w1.size + b1.size + w2.size + b2.size),
    )

    out_p = pl.pallas_call(
        simplenet_kernel,
        out_shape=jax.ShapeDtypeStruct((NCHUNK * OUT_DIM, bc_pad), jnp.float32),
        grid=(n_tiles,),
        in_specs=[
            pl.BlockSpec((NCHUNK * IN_DIM, tb), lambda i: (0, i)),   # packed x
            pl.BlockSpec((HID_DIM, IN_DIM), lambda i: (0, 0)),       # W1 resident
            pl.BlockSpec((HID_DIM, 1), lambda i: (0, 0)),            # b1 resident
            pl.BlockSpec((OUT_DIM, HID_DIM), lambda i: (0, 0)),      # W2 resident
            pl.BlockSpec((OUT_DIM, 1), lambda i: (0, 0)),            # b2 resident
        ],
        out_specs=pl.BlockSpec((NCHUNK * OUT_DIM, tb), lambda i: (0, i)),
        compiler_params=pltpu.CompilerParams(
            dimension_semantics=("parallel",),   # split batch across TCs (v7x)
            vmem_limit_bytes=32 << 20,
        ),
        cost_estimate=cost,
    )(xp, w1.astype(jnp.float32), b1c, w2.astype(jnp.float32), b2c)

    # Unpack (8, bc_pad) -> (b_pad, 2) -> slice off the padded tail.
    out = out_p.reshape(NCHUNK, OUT_DIM, bc_pad).transpose(0, 2, 1).reshape(
        b_pad, OUT_DIM)
    return out[:B]


def init_params(key):
    # Mimic nn.Linear default init: U(-1/sqrt(fan_in), 1/sqrt(fan_in)),
    # PyTorch weight convention (out_features, in_features).
    k1, k2, k3, k4 = jax.random.split(key, 4)
    bound1 = 1.0 / jnp.sqrt(IN_DIM)
    bound2 = 1.0 / jnp.sqrt(HID_DIM)
    w1 = jax.random.uniform(k1, (HID_DIM, IN_DIM), jnp.float32, -bound1, bound1)
    b1 = jax.random.uniform(k2, (HID_DIM,), jnp.float32, -bound1, bound1)
    w2 = jax.random.uniform(k3, (OUT_DIM, HID_DIM), jnp.float32, -bound2, bound2)
    b2 = jax.random.uniform(k4, (OUT_DIM,), jnp.float32, -bound2, bound2)
    return w1, b1, w2, b2


def _reference(x, w1, b1, w2, b2):
    return jnp.maximum(x @ w1.T + b1, 0.0) @ w2.T + b2


if __name__ == "__main__":
    key = jax.random.PRNGKey(0)
    kx, kp = jax.random.split(key)
    w1, b1, w2, b2 = init_params(kp)

    # Small batch, forced through the Pallas path (exercises tail padding:
    # 8 samples -> one (8, 128) packed tile).
    batch = 8
    x = jax.random.normal(kx, (batch, IN_DIM), jnp.float32)
    y = jax.block_until_ready(
        simplenet_forward(x, w1, b1, w2, b2, use_pallas=True))
    ref = _reference(x, w1, b1, w2, b2)
    assert y.shape == (batch, OUT_DIM)
    assert jnp.allclose(y, ref, atol=1e-5, rtol=1e-5)

    # Multi-tile pipelined path: 2048 samples with tb=128 -> 4 grid steps.
    batch2 = 2048
    x2 = jax.random.normal(jax.random.PRNGKey(1), (batch2, IN_DIM), jnp.float32)
    y2 = jax.block_until_ready(
        simplenet_forward(x2, w1, b1, w2, b2, tb=128, use_pallas=True))
    ref2 = _reference(x2, w1, b1, w2, b2)
    assert y2.shape == (batch2, OUT_DIM)
    assert jnp.allclose(y2, ref2, atol=1e-5, rtol=1e-5)

    # Non-multiple-of-4 batch (chunk-tail padding) through the Pallas path.
    batch3 = 300
    x3 = jax.random.normal(jax.random.PRNGKey(2), (batch3, IN_DIM), jnp.float32)
    y3 = jax.block_until_ready(
        simplenet_forward(x3, w1, b1, w2, b2, use_pallas=True))
    ref3 = _reference(x3, w1, b1, w2, b2)
    assert jnp.allclose(y3, ref3, atol=1e-5, rtol=1e-5)

    # Default (auto) small-batch path uses the jnp fallback.
    y4 = jax.block_until_ready(simplenet_forward(x, w1, b1, w2, b2))
    assert jnp.allclose(y4, ref, atol=1e-5, rtol=1e-5)

    print("KERNEL_OK")
</pallas_src>

<mosaic_0001>
module attributes {stable_mosaic.version = 11 : i64} {
  func.func @simplenet_kernel(%arg0: i32, %arg1: memref<8x128xf32, #tpu.memory_space<vmem>>, %arg2: memref<32x2xf32, #tpu.memory_space<vmem>>, %arg3: memref<32x1xf32, #tpu.memory_space<vmem>>, %arg4: memref<2x32xf32, #tpu.memory_space<vmem>>, %arg5: memref<2x1xf32, #tpu.memory_space<vmem>>, %arg6: memref<8x128xf32, #tpu.memory_space<vmem>>) attributes {dimension_semantics = [#tpu.dimension_semantics<parallel>], iteration_bounds = array<i64: 1>, scalar_prefetch = 0 : i64, scratch_operands = 0 : i64, tpu.core_type = #tpu.core_type<tc>, window_params = [{transform_indices = @transform_0, window_bounds = array<i64: 8, 128>}, {pipeline_mode = #tpu.pipeline_mode<synchronous>, transform_indices = @transform_1, window_bounds = array<i64: 32, 2>}, {pipeline_mode = #tpu.pipeline_mode<synchronous>, transform_indices = @transform_2, window_bounds = array<i64: 32, 1>}, {pipeline_mode = #tpu.pipeline_mode<synchronous>, transform_indices = @transform_3, window_bounds = array<i64: 2, 32>}, {pipeline_mode = #tpu.pipeline_mode<synchronous>, transform_indices = @transform_4, window_bounds = array<i64: 2, 1>}, {transform_indices = @transform_5, window_bounds = array<i64: 8, 128>}]} {
    %c0 = arith.constant 0 : index
    %c0_0 = arith.constant 0 : index
    %0 = vector.load %arg1[%c0, %c0_0] : memref<8x128xf32, #tpu.memory_space<vmem>>, vector<8x128xf32>
    %c0_1 = arith.constant 0 : index
    %c0_2 = arith.constant 0 : index
    %1 = vector.load %arg2[%c0_1, %c0_2] : memref<32x2xf32, #tpu.memory_space<vmem>>, vector<32x2xf32>
    %c0_3 = arith.constant 0 : index
    %c0_4 = arith.constant 0 : index
    %2 = vector.load %arg4[%c0_3, %c0_4] : memref<2x32xf32, #tpu.memory_space<vmem>>, vector<2x32xf32>
    %c0_5 = arith.constant 0 : index
    %c0_6 = arith.constant 0 : index
    %3 = vector.load %arg3[%c0_5, %c0_6] : memref<32x1xf32, #tpu.memory_space<vmem>>, vector<32x1xf32>
    %c0_7 = arith.constant 0 : index
    %c0_8 = arith.constant 0 : index
    %4 = vector.load %arg5[%c0_7, %c0_8] : memref<2x1xf32, #tpu.memory_space<vmem>>, vector<2x1xf32>
    %5 = vector.extract_strided_slice %1 {offsets = [0, 0], sizes = [32, 1], strides = [1, 1]} : vector<32x2xf32> to vector<32x1xf32>
    %6 = vector.extract_strided_slice %1 {offsets = [0, 1], sizes = [32, 1], strides = [1, 1]} : vector<32x2xf32> to vector<32x1xf32>
    %7 = vector.extract_strided_slice %0 {offsets = [0, 0], sizes = [1, 128], strides = [1, 1]} : vector<8x128xf32> to vector<1x128xf32>
    %8 = vector.extract_strided_slice %0 {offsets = [1, 0], sizes = [1, 128], strides = [1, 1]} : vector<8x128xf32> to vector<1x128xf32>
    %9 = vector.broadcast %5 : vector<32x1xf32> to vector<32x128xf32>
    %10 = vector.broadcast %7 : vector<1x128xf32> to vector<32x128xf32>
    %11 = arith.mulf %9, %10 : vector<32x128xf32>
    %12 = vector.broadcast %3 : vector<32x1xf32> to vector<32x128xf32>
    %13 = arith.addf %12, %11 : vector<32x128xf32>
    %14 = vector.broadcast %6 : vector<32x1xf32> to vector<32x128xf32>
    %15 = vector.broadcast %8 : vector<1x128xf32> to vector<32x128xf32>
    %16 = arith.mulf %14, %15 : vector<32x128xf32>
    %17 = arith.addf %13, %16 : vector<32x128xf32>
    %cst = arith.constant 0.000000e+00 : f32
    %18 = vector.broadcast %cst : f32 to vector<32x128xf32>
    %19 = arith.maximumf %17, %18 : vector<32x128xf32>
    %cst_9 = arith.constant dense<0.000000e+00> : vector<2x128xf32>
    %20 = tpu.matmul %2, %19, %cst_9 {dimension_numbers = #tpu.dot_dimension_numbers<[1], [0], [0], [1], [0, 0, 1, 1], [], []>} : vector<2x32xf32>, vector<32x128xf32>, vector<2x128xf32> -> vector<2x128xf32>
    %21 = vector.broadcast %4 : vector<2x1xf32> to vector<2x128xf32>
    %22 = arith.addf %20, %21 : vector<2x128xf32>
    %c0_10 = arith.constant 0 : index
    %c0_11 = arith.constant 0 : index
    %23 = vector.load %arg6[%c0_10, %c0_11] : memref<8x128xf32, #tpu.memory_space<vmem>>, vector<2x128xf32>
    tpu.vector_store %arg6[%c0_10, %c0_11], %22 {strides = array<i32>} : memref<8x128xf32, #tpu.memory_space<vmem>>, vector<2x128xf32>,
    %24 = vector.extract_strided_slice %0 {offsets = [2, 0], sizes = [1, 128], strides = [1, 1]} : vector<8x128xf32> to vector<1x128xf32>
    %25 = vector.extract_strided_slice %0 {offsets = [3, 0], sizes = [1, 128], strides = [1, 1]} : vector<8x128xf32> to vector<1x128xf32>
    %26 = vector.broadcast %5 : vector<32x1xf32> to vector<32x128xf32>
    %27 = vector.broadcast %24 : vector<1x128xf32> to vector<32x128xf32>
    %28 = arith.mulf %26, %27 : vector<32x128xf32>
    %29 = vector.broadcast %3 : vector<32x1xf32> to vector<32x128xf32>
    %30 = arith.addf %29, %28 : vector<32x128xf32>
    %31 = vector.broadcast %6 : vector<32x1xf32> to vector<32x128xf32>
    %32 = vector.broadcast %25 : vector<1x128xf32> to vector<32x128xf32>
    %33 = arith.mulf %31, %32 : vector<32x128xf32>
    %34 = arith.addf %30, %33 : vector<32x128xf32>
    %cst_12 = arith.constant 0.000000e+00 : f32
    %35 = vector.broadcast %cst_12 : f32 to vector<32x128xf32>
    %36 = arith.maximumf %34, %35 : vector<32x128xf32>
    %cst_13 = arith.constant dense<0.000000e+00> : vector<2x128xf32>
    %37 = tpu.matmul %2, %36, %cst_13 {dimension_numbers = #tpu.dot_dimension_numbers<[1], [0], [0], [1], [0, 0, 1, 1], [], []>} : vector<2x32xf32>, vector<32x128xf32>, vector<2x128xf32> -> vector<2x128xf32>
    %38 = vector.broadcast %4 : vector<2x1xf32> to vector<2x128xf32>
    %39 = arith.addf %37, %38 : vector<2x128xf32>
    %c2 = arith.constant 2 : index
    %c0_14 = arith.constant 0 : index
    %40 = vector.load %arg6[%c2, %c0_14] : memref<8x128xf32, #tpu.memory_space<vmem>>, vector<2x128xf32>
    tpu.vector_store %arg6[%c2, %c0_14], %39 {strides = array<i32>} : memref<8x128xf32, #tpu.memory_space<vmem>>, vector<2x128xf32>,
    %41 = vector.extract_strided_slice %0 {offsets = [4, 0], sizes = [1, 128], strides = [1, 1]} : vector<8x128xf32> to vector<1x128xf32>
    %42 = vector.extract_strided_slice %0 {offsets = [5, 0], sizes = [1, 128], strides = [1, 1]} : vector<8x128xf32> to vector<1x128xf32>
    %43 = vector.broadcast %5 : vector<32x1xf32> to vector<32x128xf32>
    %44 = vector.broadcast %41 : vector<1x128xf32> to vector<32x128xf32>
    %45 = arith.mulf %43, %44 : vector<32x128xf32>
    %46 = vector.broadcast %3 : vector<32x1xf32> to vector<32x128xf32>
    %47 = arith.addf %46, %45 : vector<32x128xf32>
    %48 = vector.broadcast %6 : vector<32x1xf32> to vector<32x128xf32>
    %49 = vector.broadcast %42 : vector<1x128xf32> to vector<32x128xf32>
    %50 = arith.mulf %48, %49 : vector<32x128xf32>
    %51 = arith.addf %47, %50 : vector<32x128xf32>
    %cst_15 = arith.constant 0.000000e+00 : f32
    %52 = vector.broadcast %cst_15 : f32 to vector<32x128xf32>
    %53 = arith.maximumf %51, %52 : vector<32x128xf32>
    %cst_16 = arith.constant dense<0.000000e+00> : vector<2x128xf32>
    %54 = tpu.matmul %2, %53, %cst_16 {dimension_numbers = #tpu.dot_dimension_numbers<[1], [0], [0], [1], [0, 0, 1, 1], [], []>} : vector<2x32xf32>, vector<32x128xf32>, vector<2x128xf32> -> vector<2x128xf32>
    %55 = vector.broadcast %4 : vector<2x1xf32> to vector<2x128xf32>
    %56 = arith.addf %54, %55 : vector<2x128xf32>
    %c4 = arith.constant 4 : index
    %c0_17 = arith.constant 0 : index
    %57 = vector.load %arg6[%c4, %c0_17] : memref<8x128xf32, #tpu.memory_space<vmem>>, vector<2x128xf32>
    tpu.vector_store %arg6[%c4, %c0_17], %56 {strides = array<i32>} : memref<8x128xf32, #tpu.memory_space<vmem>>, vector<2x128xf32>,
    %58 = vector.extract_strided_slice %0 {offsets = [6, 0], sizes = [1, 128], strides = [1, 1]} : vector<8x128xf32> to vector<1x128xf32>
    %59 = vector.extract_strided_slice %0 {offsets = [7, 0], sizes = [1, 128], strides = [1, 1]} : vector<8x128xf32> to vector<1x128xf32>
    %60 = vector.broadcast %5 : vector<32x1xf32> to vector<32x128xf32>
    %61 = vector.broadcast %58 : vector<1x128xf32> to vector<32x128xf32>
    %62 = arith.mulf %60, %61 : vector<32x128xf32>
    %63 = vector.broadcast %3 : vector<32x1xf32> to vector<32x128xf32>
    %64 = arith.addf %63, %62 : vector<32x128xf32>
    %65 = vector.broadcast %6 : vector<32x1xf32> to vector<32x128xf32>
    %66 = vector.broadcast %59 : vector<1x128xf32> to vector<32x128xf32>
    %67 = arith.mulf %65, %66 : vector<32x128xf32>
    %68 = arith.addf %64, %67 : vector<32x128xf32>
    %cst_18 = arith.constant 0.000000e+00 : f32
    %69 = vector.broadcast %cst_18 : f32 to vector<32x128xf32>
    %70 = arith.maximumf %68, %69 : vector<32x128xf32>
    %cst_19 = arith.constant dense<0.000000e+00> : vector<2x128xf32>
    %71 = tpu.matmul %2, %70, %cst_19 {dimension_numbers = #tpu.dot_dimension_numbers<[1], [0], [0], [1], [0, 0, 1, 1], [], []>} : vector<2x32xf32>, vector<32x128xf32>, vector<2x128xf32> -> vector<2x128xf32>
    %72 = vector.broadcast %4 : vector<2x1xf32> to vector<2x128xf32>
    %73 = arith.addf %71, %72 : vector<2x128xf32>
    %c6 = arith.constant 6 : index
    %c0_20 = arith.constant 0 : index
    %74 = vector.load %arg6[%c6, %c0_20] : memref<8x128xf32, #tpu.memory_space<vmem>>, vector<2x128xf32>
    tpu.vector_store %arg6[%c6, %c0_20], %73 {strides = array<i32>} : memref<8x128xf32, #tpu.memory_space<vmem>>, vector<2x128xf32>,
    return
  }
  func.func @transform_0(%arg0: i32) -> (i32, i32) {
    %c0_i32 = arith.constant 0 : i32
    %c0_i32_0 = arith.constant 0 : i32
    return %c0_i32, %arg0 : i32, i32
  }
  func.func @transform_1(%arg0: i32) -> (i32, i32) {
    %c0_i32 = arith.constant 0 : i32
    %c0_i32_0 = arith.constant 0 : i32
    %c0_i32_1 = arith.constant 0 : i32
    return %c0_i32, %c0_i32_0 : i32, i32
  }
  func.func @transform_2(%arg0: i32) -> (i32, i32) {
    %c0_i32 = arith.constant 0 : i32
    %c0_i32_0 = arith.constant 0 : i32
    %c0_i32_1 = arith.constant 0 : i32
    return %c0_i32, %c0_i32_0 : i32, i32
  }
  func.func @transform_3(%arg0: i32) -> (i32, i32) {
    %c0_i32 = arith.constant 0 : i32
    %c0_i32_0 = arith.constant 0 : i32
    %c0_i32_1 = arith.constant 0 : i32
    return %c0_i32, %c0_i32_0 : i32, i32
  }
  func.func @transform_4(%arg0: i32) -> (i32, i32) {
    %c0_i32 = arith.constant 0 : i32
    %c0_i32_0 = arith.constant 0 : i32
    %c0_i32_1 = arith.constant 0 : i32
    return %c0_i32, %c0_i32_0 : i32, i32
  }
  func.func @transform_5(%arg0: i32) -> (i32, i32) {
    %c0_i32 = arith.constant 0 : i32
    %c0_i32_0 = arith.constant 0 : i32
    return %c0_i32, %arg0 : i32, i32
  }
}

</mosaic_0001>

<llo_original>
// kernel: tpu_custom_call.1
$region0: #{tpu_custom_call.1}
  #allocation0 [shape = 'u32[]', space=smem, size = 0x4, offset = 0x4, fixed_abs, tag = 'smem constant byte address 0x4 - core index']
  #allocation1 [shape = 'u32[144,128]{1,0:T(1,128)}', space=vmem, size = 0x12000, scoped, tag = 'internal scratch']
  %s0 = inlined_call_operand.vmem [shape: f32[8,128], index: 0, kind: input, shape index: {}]
  %s1 = inlined_call_operand.vmem [shape: f32[32,2], index: 1, kind: input, shape index: {}]
  %s2 = inlined_call_operand.vmem [shape: f32[32,1], index: 2, kind: input, shape index: {}]
  %s3 = inlined_call_operand.vmem [shape: f32[2,32], index: 3, kind: input, shape index: {}]
  %s4 = inlined_call_operand.vmem [shape: f32[2,1], index: 4, kind: input, shape index: {}]
  %s5 = inlined_call_operand.hbm [shape: f32[8,128], index: 5, kind: output, shape index: {}]
  %s6 = sld [smem:[#allocation0]]
  $region30: #{tpu_custom_call.1} parent=0
    _
  %s8 = ssub.s32 1, %s6
  %s9 = scalar_select 0, %s8, %s6
  $region1: #{tpu_custom_call.1} parent=0
    #allocation2 [shape = 'u8[4096]{0}', space=vmem, size = 0x1000, scoped, tag = 'output window, operand 0, single buffered']
    #allocation3 [shape = 's32[1]{0}', space=sflag, size = 0x4, scoped, tag = 'scoped memory for tpu_custom_call.1']
    %10 = vsyncpa [#allocation3], 0
    // Predicated region
    $region2: #{tpu_custom_call.1} parent=1 // pred_check
      _
    $region3: #{tpu_custom_call.1} parent=1 // pred_check_branch
      %12 = sbr.rel (0) target = $region5
    $region4: #{tpu_custom_call.1} parent=1 // pred_region
      _
    $region5: #{tpu_custom_call.1} parent=1 // pred_fallthru
      _
    // Predicated region
    $region6: #{tpu_custom_call.1} parent=1 // pred_check
      _
    $region7: #{tpu_custom_call.1} parent=1 // pred_check_branch
      %14 = sbr.rel (0) target = $region9
    $region8: #{tpu_custom_call.1} parent=1 // pred_region
      _
    $region9: #{tpu_custom_call.1} parent=1 // pred_fallthru
      _
    // Predicated region
    $region10: #{tpu_custom_call.1} parent=1 // pred_check
      _
    $region11: #{tpu_custom_call.1} parent=1 // pred_check_branch
      %16 = sbr.rel (0) target = $region13
    $region12: #{tpu_custom_call.1} parent=1 // pred_region
      _
    $region13: #{tpu_custom_call.1} parent=1 // pred_fallthru
      _
    // Predicated region
    $region14: #{tpu_custom_call.1} parent=1 // pred_check
      _
    $region15: #{tpu_custom_call.1} parent=1 // pred_check_branch
      %18 = sbr.rel (0) target = $region17
    $region16: #{tpu_custom_call.1} parent=1 // pred_region
      _
    $region17: #{tpu_custom_call.1} parent=1 // pred_fallthru
      _
    // Predicated region
    $region18: #{tpu_custom_call.1} parent=1 // pred_check
      _
    $region19: #{tpu_custom_call.1} parent=1 // pred_check_branch
      %20 = sbr.rel (0) target = $region21
    $region20: #{tpu_custom_call.1} parent=1 // pred_region
      _
    $region21: #{tpu_custom_call.1} parent=1 // pred_fallthru
      _
    %v21 = vld [vmem:[%s0] sm:$0xff]
    %v22 = vld [vmem:[%s1] sm:$0xff]
    %v23 = vld [vmem:[%s1 + $0x8] sm:$0xff]
    %v24 = vld [vmem:[%s1 + $0x10] sm:$0xff]
    %v25 = vld [vmem:[%s1 + $0x18] sm:$0xff]
    %v26 = vld [vmem:[%s3] sm:$0x3]
    %v27 = vld [vmem:[%s2] sm:$0xff]
    %v28 = vld [vmem:[%s2 + $0x8] sm:$0xff]
    %v29 = vld [vmem:[%s2 + $0x10] sm:$0xff]
    %v30 = vld [vmem:[%s2 + $0x18] sm:$0xff]
    %v31 = vld [vmem:[%s4] sm:$0x3]
    %33 = vset.pattern.permute.xlu0 0
    %34 = vperm.xlu0 %33, %v22
    %v35 = vpop.permute.xlu0 %34
    %38 = vset.pattern.permute.xlu0 0
    %39 = vperm.xlu0 %38, %v23
    %v40 = vpop.permute.xlu0 %39
    %43 = vset.pattern.permute.xlu0 0
    %44 = vperm.xlu0 %43, %v24
    %v45 = vpop.permute.xlu0 %44
    %48 = vset.pattern.permute.xlu0 0
    %49 = vperm.xlu0 %48, %v25
    %v50 = vpop.permute.xlu0 %49
    %v52 = vlaneseq
    %v53 = vshrl.u32 %v52, 7
    %v54 = vsub.s32 0, %v53
    %v55 = vrot.slane %v21, %v54
    %v56 = vmul.f32 %v35, %v55
    %v57 = vmul.f32 %v40, %v55
    %v58 = vmul.f32 %v45, %v55
    %v59 = vmul.f32 %v50, %v55
    %61 = vset.pattern.permute.xlu0 0
    %62 = vperm.xlu0 %61, %v27
    %v63 = vpop.permute.xlu0 %62
    %66 = vset.pattern.permute.xlu0 0
    %67 = vperm.xlu0 %66, %v28
    %v68 = vpop.permute.xlu0 %67
    %71 = vset.pattern.permute.xlu0 0
    %72 = vperm.xlu0 %71, %v29
    %v73 = vpop.permute.xlu0 %72
    %76 = vset.pattern.permute.xlu0 0
    %77 = vperm.xlu0 %76, %v30
    %v78 = vpop.permute.xlu0 %77
    %v80 = vadd.f32 %v63, %v56
    %v81 = vadd.f32 %v68, %v57
    %v82 = vadd.f32 %v73, %v58
    %v83 = vadd.f32 %v78, %v59
    %84 = vset.pattern.permute.xlu0 1
    %85 = vperm.xlu0 %84, %v22
    %v86 = vpop.permute.xlu0 %85
    %88 = vset.pattern.permute.xlu0 1
    %89 = vperm.xlu0 %88, %v23
    %v90 = vpop.permute.xlu0 %89
    %92 = vset.pattern.permute.xlu0 1
    %93 = vperm.xlu0 %92, %v24
    %v94 = vpop.permute.xlu0 %93
    %96 = vset.pattern.permute.xlu0 1
    %97 = vperm.xlu0 %96, %v25
    %v98 = vpop.permute.xlu0 %97
    %v100 = vlaneseq
    %v101 = vshrl.u32 %v100, 7
    %v102 = vsub.s32 1, %v101
    %v103 = vrot.slane %v21, %v102
    %v104 = vmul.f32 %v86, %v103
    %v105 = vmul.f32 %v90, %v103
    %v106 = vmul.f32 %v94, %v103
    %v107 = vmul.f32 %v98, %v103
    %v108 = vadd.f32 %v80, %v104
    %v109 = vadd.f32 %v81, %v105
    %v110 = vadd.f32 %v82, %v106
    %v111 = vadd.f32 %v83, %v107
    %v112 = vmax.f32 %v108, 0.0
    %v113 = vmax.f32 %v109, 0.0
    %v114 = vmax.f32 %v110, 0.0
    %v115 = vmax.f32 %v111, 0.0
    %117 = vset.pattern.permute.xlu0 0
    %118 = vperm.xlu0 %117, %v31
    %v119 = vpop.permute.xlu0 %118
    %vm121 = vcmask 261120
    %v123 = vsel %vm121, %v26, 0
    %125 = vmatprep.subr.mxu0 0.0
    %126 = vmatpush1.msra.mxu0 0.0
    %127 = vmatprep.subr.mxu0 0.0
    %128 = vmatpush1.msra.mxu0 0.0
    %129 = vmatprep.subr.mxu0 0.0
    %130 = vmatpush1.msra.mxu0 0.0
    %131 = vmatprep.subr.mxu0 0.0
    %132 = vmatpush1.msra.mxu0 0.0
    %133 = vmatprep.subr.mxu0 0.0
    %134 = vmatpush1.msra.mxu0 0.0
    %135 = vmatprep.subr.mxu0 0.0
    %136 = vmatpush1.msra.mxu0 0.0
    %137 = vmatprep.subr.mxu0 0.0
    %138 = vmatpush1.msra.mxu0 0.0
    %139 = vmatprep.subr.mxu0 0.0
    %140 = vmatpush1.msra.mxu0 0.0
    %141 = vmatprep.subr.mxu0 0.0
    %142 = vmatpush1.msra.mxu0 0.0
    %143 = vmatprep.subr.mxu0 0.0
    %144 = vmatpush1.msra.mxu0 0.0
    %145 = vmatprep.subr.mxu0 0.0
    %146 = vmatpush1.msra.mxu0 0.0
    %147 = vmatprep.subr.mxu0 0.0
    %148 = vmatpush1.msra.mxu0 0.0
    %149 = vmatprep.subr.mxu0 0.0
    %150 = vmatpush1.msra.mxu0 %v115
    %151 = vmatprep.subr.mxu0 0.0
    %152 = vmatpush1.msra.mxu0 %v114
    %153 = vmatprep.subr.mxu0 0.0
    %154 = vmatpush1.msra.mxu0 %v113
    %155 = vmatprep.subr.mxu0 0.0
    %156 = vmatpush1.msra.mxu0 %v112
    %157 = vmatprep.subr.mxu0 0.0
    %158 = vmatpush2.msra.mxu0 0.0
    %159 = vmatprep.subr.mxu0 0.0
    %160 = vmatpush2.msra.mxu0 0.0
    %161 = vmatprep.subr.mxu0 0.0
    %162 = vmatpush2.msra.mxu0 0.0
    %163 = vmatprep.subr.mxu0 0.0
    %164 = vmatpush2.msra.mxu0 0.0
    %165 = vmatprep.subr.mxu0 0.0
    %166 = vmatpush2.msra.mxu0 0.0
    %167 = vmatprep.subr.mxu0 0.0
    %168 = vmatpush2.msra.mxu0 0.0
    %169 = vmatprep.subr.mxu0 0.0
    %170 = vmatpush2.msra.mxu0 0.0
    %171 = vmatprep.subr.mxu0 0.0
    %172 = vmatpush2.msra.mxu0 0.0
    %173 = vmatprep.subr.mxu0 0.0
    %174 = vmatpush2.msra.mxu0 0.0
    %175 = vmatprep.subr.mxu0 0.0
    %176 = vmatpush2.msra.mxu0 0.0
    %177 = vmatprep.subr.mxu0 0.0
    %178 = vmatpush2.msra.mxu0 0.0
    %179 = vmatprep.subr.mxu0 0.0
    %180 = vmatpush2.msra.mxu0 0.0
    %181 = vmatprep.subr.mxu0 0.0
    %182 = vmatpush2.msra.mxu0 0.0
    %183 = vmatprep.subr.mxu0 0.0
    %184 = vmatpush2.msra.mxu0 0.0
    %185 = vmatprep.subr.mxu0 0.0
    %186 = vmatpush2.msra.mxu0 0.0
    %187 = vmatprep.subr.mxu0 0.0
    %188 = vmatpush2.msra.mxu0 0.0
    %189 = vmatprep.mubr.f32.mxu0 0.0
    %190 = vmatmul.mubr.f32.gmra.mxu0 %v123
    %v191 = vpop.f32.mrf.mxu0
    %v192 = vadd.f32 %v119, %v191
    %v193 = vpop.f32.mrf.mxu0
    %194 = vdwg.mxu0
    %195 = vst [vmem:[#allocation2] sm:$0x3] %v192
    %v196 = vlaneseq
    %v197 = vshrl.u32 %v196, 7
    %v198 = vsub.s32 2, %v197
    %v199 = vrot.slane %v21, %v198
    %v200 = vmul.f32 %v35, %v199
    %v201 = vmul.f32 %v40, %v199
    %v202 = vmul.f32 %v45, %v199
    %v203 = vmul.f32 %v50, %v199
    %v204 = vadd.f32 %v63, %v200
    %v205 = vadd.f32 %v68, %v201
    %v206 = vadd.f32 %v73, %v202
    %v207 = vadd.f32 %v78, %v203
    %v208 = vlaneseq
    %v209 = vshrl.u32 %v208, 7
    %v210 = vsub.s32 3, %v209
    %v211 = vrot.slane %v21, %v210
    %v212 = vmul.f32 %v86, %v211
    %v213 = vmul.f32 %v90, %v211
    %v214 = vmul.f32 %v94, %v211
    %v215 = vmul.f32 %v98, %v211
    %v216 = vadd.f32 %v204, %v212
    %v217 = vadd.f32 %v205, %v213
    %v218 = vadd.f32 %v206, %v214
    %v219 = vadd.f32 %v207, %v215
    %v220 = vmax.f32 %v216, 0.0
    %v221 = vmax.f32 %v217, 0.0
    %v222 = vmax.f32 %v218, 0.0
    %v223 = vmax.f32 %v219, 0.0
    %224 = vmatprep.subr.mxu0 0.0
    %225 = vmatpush1.msra.mxu0 0.0
    %226 = vmatprep.subr.mxu0 0.0
    %227 = vmatpush1.msra.mxu0 0.0
    %228 = vmatprep.subr.mxu0 0.0
    %229 = vmatpush1.msra.mxu0 0.0
    %230 = vmatprep.subr.mxu0 0.0
    %231 = vmatpush1.msra.mxu0 0.0
    %232 = vmatprep.subr.mxu0 0.0
    %233 = vmatpush1.msra.mxu0 0.0
    %234 = vmatprep.subr.mxu0 0.0
    %235 = vmatpush1.msra.mxu0 0.0
    %236 = vmatprep.subr.mxu0 0.0
    %237 = vmatpush1.msra.mxu0 0.0
    %238 = vmatprep.subr.mxu0 0.0
    %239 = vmatpush1.msra.mxu0 0.0
    %240 = vmatprep.subr.mxu0 0.0
    %241 = vmatpush1.msra.mxu0 0.0
    %242 = vmatprep.subr.mxu0 0.0
    %243 = vmatpush1.msra.mxu0 0.0
    %244 = vmatprep.subr.mxu0 0.0
    %245 = vmatpush1.msra.mxu0 0.0
    %246 = vmatprep.subr.mxu0 0.0
    %247 = vmatpush1.msra.mxu0 0.0
    %248 = vmatprep.subr.mxu0 0.0
    %249 = vmatpush1.msra.mxu0 %v223
    %250 = vmatprep.subr.mxu0 0.0
    %251 = vmatpush1.msra.mxu0 %v222
    %252 = vmatprep.subr.mxu0 0.0
    %253 = vmatpush1.msra.mxu0 %v221
    %254 = vmatprep.subr.mxu0 0.0
    %255 = vmatpush1.msra.mxu0 %v220
    %256 = vmatprep.subr.mxu0 0.0
    %257 = vmatpush2.msra.mxu0 0.0
    %258 = vmatprep.subr.mxu0 0.0
    %259 = vmatpush2.msra.mxu0 0.0
    %260 = vmatprep.subr.mxu0 0.0
    %261 = vmatpush2.msra.mxu0 0.0
    %262 = vmatprep.subr.mxu0 0.0
    %263 = vmatpush2.msra.mxu0 0.0
    %264 = vmatprep.subr.mxu0 0.0
    %265 = vmatpush2.msra.mxu0 0.0
    %266 = vmatprep.subr.mxu0 0.0
    %267 = vmatpush2.msra.mxu0 0.0
    %268 = vmatprep.subr.mxu0 0.0
    %269 = vmatpush2.msra.mxu0 0.0
    %270 = vmatprep.subr.mxu0 0.0
    %271 = vmatpush2.msra.mxu0 0.0
    %272 = vmatprep.subr.mxu0 0.0
    %273 = vmatpush2.msra.mxu0 0.0
    %274 = vmatprep.subr.mxu0 0.0
    %275 = vmatpush2.msra.mxu0 0.0
    %276 = vmatprep.subr.mxu0 0.0
    %277 = vmatpush2.msra.mxu0 0.0
    %278 = vmatprep.subr.mxu0 0.0
    %279 = vmatpush2.msra.mxu0 0.0
    %280 = vmatprep.subr.mxu0 0.0
    %281 = vmatpush2.msra.mxu0 0.0
    %282 = vmatprep.subr.mxu0 0.0
    %283 = vmatpush2.msra.mxu0 0.0
    %284 = vmatprep.subr.mxu0 0.0
    %285 = vmatpush2.msra.mxu0 0.0
    %286 = vmatprep.subr.mxu0 0.0
    %287 = vmatpush2.msra.mxu0 0.0
    %288 = vmatprep.mubr.f32.mxu0 0.0
    %289 = vmatmul.mubr.f32.gmra.mxu0 %v123
    %v290 = vpop.f32.mrf.mxu0
    %v291 = vadd.f32 %v119, %v290
    %v292 = vpop.f32.mrf.mxu0
    %293 = vdwg.mxu0
    %294 = vst [vmem:[#allocation2 + $0x2] sm:$0x3] %v291
    %v295 = vlaneseq
    %v296 = vshrl.u32 %v295, 7
    %v297 = vsub.s32 4, %v296
    %v298 = vrot.slane %v21, %v297
    %v299 = vmul.f32 %v35, %v298
    %v300 = vmul.f32 %v40, %v298
    %v301 = vmul.f32 %v45, %v298
    %v302 = vmul.f32 %v50, %v298
    %v303 = vadd.f32 %v63, %v299
    %v304 = vadd.f32 %v68, %v300
    %v305 = vadd.f32 %v73, %v301
    %v306 = vadd.f32 %v78, %v302
    %v307 = vlaneseq
    %v308 = vshrl.u32 %v307, 7
    %v309 = vsub.s32 5, %v308
    %v310 = vrot.slane %v21, %v309
    %v311 = vmul.f32 %v86, %v310
    %v312 = vmul.f32 %v90, %v310
    %v313 = vmul.f32 %v94, %v310
    %v314 = vmul.f32 %v98, %v310
    %v315 = vadd.f32 %v303, %v311
    %v316 = vadd.f32 %v304, %v312
    %v317 = vadd.f32 %v305, %v313
    %v318 = vadd.f32 %v306, %v314
    %v319 = vmax.f32 %v315, 0.0
    %v320 = vmax.f32 %v316, 0.0
    %v321 = vmax.f32 %v317, 0.0
    %v322 = vmax.f32 %v318, 0.0
    %323 = vmatprep.subr.mxu0 0.0
    %324 = vmatpush1.msra.mxu0 0.0
    %325 = vmatprep.subr.mxu0 0.0
    %326 = vmatpush1.msra.mxu0 0.0
    %327 = vmatprep.subr.mxu0 0.0
    %328 = vmatpush1.msra.mxu0 0.0
    %329 = vmatprep.subr.mxu0 0.0
    %330 = vmatpush1.msra.mxu0 0.0
    %331 = vmatprep.subr.mxu0 0.0
    %332 = vmatpush1.msra.mxu0 0.0
    %333 = vmatprep.subr.mxu0 0.0
    %334 = vmatpush1.msra.mxu0 0.0
    %335 = vmatprep.subr.mxu0 0.0
    %336 = vmatpush1.msra.mxu0 0.0
    %337 = vmatprep.subr.mxu0 0.0
    %338 = vmatpush1.msra.mxu0 0.0
    %339 = vmatprep.subr.mxu0 0.0
    %340 = vmatpush1.msra.mxu0 0.0
    %341 = vmatprep.subr.mxu0 0.0
    %342 = vmatpush1.msra.mxu0 0.0
    %343 = vmatprep.subr.mxu0 0.0
    %344 = vmatpush1.msra.mxu0 0.0
    %345 = vmatprep.subr.mxu0 0.0
    %346 = vmatpush1.msra.mxu0 0.0
    %347 = vmatprep.subr.mxu0 0.0
    %348 = vmatpush1.msra.mxu0 %v322
    %349 = vmatprep.subr.mxu0 0.0
    %350 = vmatpush1.msra.mxu0 %v321
    %351 = vmatprep.subr.mxu0 0.0
    %352 = vmatpush1.msra.mxu0 %v320
    %353 = vmatprep.subr.mxu0 0.0
    %354 = vmatpush1.msra.mxu0 %v319
    %355 = vmatprep.subr.mxu0 0.0
    %356 = vmatpush2.msra.mxu0 0.0
    %357 = vmatprep.subr.mxu0 0.0
    %358 = vmatpush2.msra.mxu0 0.0
    %359 = vmatprep.subr.mxu0 0.0
    %360 = vmatpush2.msra.mxu0 0.0
    %361 = vmatprep.subr.mxu0 0.0
    %362 = vmatpush2.msra.mxu0 0.0
    %363 = vmatprep.subr.mxu0 0.0
    %364 = vmatpush2.msra.mxu0 0.0
    %365 = vmatprep.subr.mxu0 0.0
    %366 = vmatpush2.msra.mxu0 0.0
    %367 = vmatprep.subr.mxu0 0.0
    %368 = vmatpush2.msra.mxu0 0.0
    %369 = vmatprep.subr.mxu0 0.0
    %370 = vmatpush2.msra.mxu0 0.0
    %371 = vmatprep.subr.mxu0 0.0
    %372 = vmatpush2.msra.mxu0 0.0
    %373 = vmatprep.subr.mxu0 0.0
    %374 = vmatpush2.msra.mxu0 0.0
    %375 = vmatprep.subr.mxu0 0.0
    %376 = vmatpush2.msra.mxu0 0.0
    %377 = vmatprep.subr.mxu0 0.0
    %378 = vmatpush2.msra.mxu0 0.0
    %379 = vmatprep.subr.mxu0 0.0
    %380 = vmatpush2.msra.mxu0 0.0
    %381 = vmatprep.subr.mxu0 0.0
    %382 = vmatpush2.msra.mxu0 0.0
    %383 = vmatprep.subr.mxu0 0.0
    %384 = vmatpush2.msra.mxu0 0.0
    %385 = vmatprep.subr.mxu0 0.0
    %386 = vmatpush2.msra.mxu0 0.0
    %387 = vmatprep.mubr.f32.mxu0 0.0
    %388 = vmatmul.mubr.f32.gmra.mxu0 %v123
    %v389 = vpop.f32.mrf.mxu0
    %v390 = vadd.f32 %v119, %v389
    %v391 = vpop.f32.mrf.mxu0
    %392 = vdwg.mxu0
    %393 = vst [vmem:[#allocation2 + $0x4] sm:$0x3] %v390
    %v394 = vlaneseq
    %v395 = vshrl.u32 %v394, 7
    %v396 = vsub.s32 6, %v395
    %v397 = vrot.slane %v21, %v396
    %v398 = vmul.f32 %v35, %v397
    %v399 = vmul.f32 %v40, %v397
    %v400 = vmul.f32 %v45, %v397
    %v401 = vmul.f32 %v50, %v397
    %v402 = vadd.f32 %v63, %v398
    %v403 = vadd.f32 %v68, %v399
    %v404 = vadd.f32 %v73, %v400
    %v405 = vadd.f32 %v78, %v401
    %v406 = vlaneseq
    %v407 = vshrl.u32 %v406, 7
    %v408 = vsub.s32 7, %v407
    %v409 = vrot.slane %v21, %v408
    %v410 = vmul.f32 %v86, %v409
    %v411 = vmul.f32 %v90, %v409
    %v412 = vmul.f32 %v94, %v409
    %v413 = vmul.f32 %v98, %v409
    %v414 = vadd.f32 %v402, %v410
    %v415 = vadd.f32 %v403, %v411
    %v416 = vadd.f32 %v404, %v412
    %v417 = vadd.f32 %v405, %v413
    %v418 = vmax.f32 %v414, 0.0
    %v419 = vmax.f32 %v415, 0.0
    %v420 = vmax.f32 %v416, 0.0
    %v421 = vmax.f32 %v417, 0.0
    %422 = vmatprep.subr.mxu0 0.0
    %423 = vmatpush1.msra.mxu0 0.0
    %424 = vmatprep.subr.mxu0 0.0
    %425 = vmatpush1.msra.mxu0 0.0
    %426 = vmatprep.subr.mxu0 0.0
    %427 = vmatpush1.msra.mxu0 0.0
    %428 = vmatprep.subr.mxu0 0.0
    %429 = vmatpush1.msra.mxu0 0.0
    %430 = vmatprep.subr.mxu0 0.0
    %431 = vmatpush1.msra.mxu0 0.0
    %432 = vmatprep.subr.mxu0 0.0
    %433 = vmatpush1.msra.mxu0 0.0
    %434 = vmatprep.subr.mxu0 0.0
    %435 = vmatpush1.msra.mxu0 0.0
    %436 = vmatprep.subr.mxu0 0.0
    %437 = vmatpush1.msra.mxu0 0.0
    %438 = vmatprep.subr.mxu0 0.0
    %439 = vmatpush1.msra.mxu0 0.0
    %440 = vmatprep.subr.mxu0 0.0
    %441 = vmatpush1.msra.mxu0 0.0
    %442 = vmatprep.subr.mxu0 0.0
    %443 = vmatpush1.msra.mxu0 0.0
    %444 = vmatprep.subr.mxu0 0.0
    %445 = vmatpush1.msra.mxu0 0.0
    %446 = vmatprep.subr.mxu0 0.0
    %447 = vmatpush1.msra.mxu0 %v421
    %448 = vmatprep.subr.mxu0 0.0
    %449 = vmatpush1.msra.mxu0 %v420
    %450 = vmatprep.subr.mxu0 0.0
    %451 = vmatpush1.msra.mxu0 %v419
    %452 = vmatprep.subr.mxu0 0.0
    %453 = vmatpush1.msra.mxu0 %v418
    %454 = vmatprep.subr.mxu0 0.0
    %455 = vmatpush2.msra.mxu0 0.0
    %456 = vmatprep.subr.mxu0 0.0
    %457 = vmatpush2.msra.mxu0 0.0
    %458 = vmatprep.subr.mxu0 0.0
    %459 = vmatpush2.msra.mxu0 0.0
    %460 = vmatprep.subr.mxu0 0.0
    %461 = vmatpush2.msra.mxu0 0.0
    %462 = vmatprep.subr.mxu0 0.0
    %463 = vmatpush2.msra.mxu0 0.0
    %464 = vmatprep.subr.mxu0 0.0
    %465 = vmatpush2.msra.mxu0 0.0
    %466 = vmatprep.subr.mxu0 0.0
    %467 = vmatpush2.msra.mxu0 0.0
    %468 = vmatprep.subr.mxu0 0.0
    %469 = vmatpush2.msra.mxu0 0.0
    %470 = vmatprep.subr.mxu0 0.0
    %471 = vmatpush2.msra.mxu0 0.0
    %472 = vmatprep.subr.mxu0 0.0
    %473 = vmatpush2.msra.mxu0 0.0
    %474 = vmatprep.subr.mxu0 0.0
    %475 = vmatpush2.msra.mxu0 0.0
    %476 = vmatprep.subr.mxu0 0.0
    %477 = vmatpush2.msra.mxu0 0.0
    %478 = vmatprep.subr.mxu0 0.0
    %479 = vmatpush2.msra.mxu0 0.0
    %480 = vmatprep.subr.mxu0 0.0
    %481 = vmatpush2.msra.mxu0 0.0
    %482 = vmatprep.subr.mxu0 0.0
    %483 = vmatpush2.msra.mxu0 0.0
    %484 = vmatprep.subr.mxu0 0.0
    %485 = vmatpush2.msra.mxu0 0.0
    %486 = vmatprep.mubr.f32.mxu0 0.0
    %487 = vmatmul.mubr.f32.gmra.mxu0 %v123
    %v488 = vpop.f32.mrf.mxu0
    %v489 = vadd.f32 %v119, %v488
    %v490 = vpop.f32.mrf.mxu0
    %491 = vdwg.mxu0
    %492 = vst [vmem:[#allocation2 + $0x6] sm:$0x3] %v489
    // Predicated region
    $region22: #{tpu_custom_call.1} parent=1 // pred_check
      _
    $region23: #{tpu_custom_call.1} parent=1 // pred_check_branch
      %494 = sbr.rel (0) target = $region25
    $region24: #{tpu_custom_call.1} parent=1 // pred_region
      %s496 = ssub.s32 128, 128
      %497 = vsyncadd [#allocation3], %s496
      %s499 = sshll.u32 [#allocation2], 4
      %s500 = int_to_ptr.vmem [resolvable:$true] %s499
      %502 = dma.vmem_to_hbm [thread:$0]  %s500, 128, %s5, [#allocation3]
    $region25: #{tpu_custom_call.1} parent=1 // pred_fallthru
      _
    // Predicated region
    $region26: #{tpu_custom_call.1} parent=1 // pred_check
      _
    $region27: #{tpu_custom_call.1} parent=1 // pred_check_branch
      %504 = sbr.rel (0) target = $region29
    $region28: #{tpu_custom_call.1} parent=1 // pred_region
      %505 = dma.done [#allocation3], 128
    $region29: #{tpu_custom_call.1} parent=1 // pred_fallthru
      _
    %506 = vsyncpa [#allocation3], 1

</llo_original>
